<compile_context>
chip_gen: v6e
topology: v6e:2x2x1
jax: 0.10.0
libtpu: 0.0.40
codegen_flags: <defaults>
</compile_context>

<pallas_src>
import jax
import jax.numpy as jnp
from jax.experimental import pallas as pl
from jax.experimental.pallas import tpu as pltpu


def _value_kernel(x_ref, w1_ref, b1_ref, w2_ref, b2_ref, w3_ref, b3_ref,
                  v_ref):
    i = pl.program_id(0)

    x = x_ref[...]                                             # (tile_b, d_in)
    # layer 1: (tile_b, d_in) @ (d_in, H) + (1, H), ReLU  (f32 accumulation)
    h = jnp.dot(x, w1_ref[...], preferred_element_type=jnp.float32) + b1_ref[...]
    h = jnp.maximum(h, 0.0).astype(w2_ref.dtype)
    # layer 2: (tile_b, H) @ (H, H) + (1, H), ReLU
    h = jnp.dot(h, w2_ref[...], preferred_element_type=jnp.float32) + b2_ref[...]
    h = jnp.maximum(h, 0.0).astype(w3_ref.dtype)
    # layer 3 as a lane-dense row:  (1, H) . (tile_b, H)^T -> (1, tile_b)
    v = jax.lax.dot_general(w3_ref[...], h,
                            dimension_numbers=(((1,), (1,)), ((), ())),
                            preferred_element_type=jnp.float32)
    v = v + b3_ref[...]                                        # (1, tile_b)
    # Store this tile's row of the VMEM-resident (num_tiles, tile_b) output.
    v_ref[pl.ds(i, 1), :] = v.astype(v_ref.dtype)


def _round_up(x, m):
    return ((x + m - 1) // m) * m


def _vmem_limit_bytes():
    # Generation-aware scoped-VMEM limit: ~3/4 of physical, capped at 96 MiB.
    # v5e/v6e: 128 MiB physical -> 96 MiB; v7x: 64 MiB physical -> 48 MiB.
    try:
        cap = int(pltpu.get_tpu_info().vmem_capacity_bytes)
    except Exception:
        cap = 64 * 1024 * 1024      # conservative fallback (v7x per-core VMEM)
    return min(cap * 3 // 4, 96 * 1024 * 1024)


def _choose_tile_b(B, d_in, H, x_bytes, w_bytes, vmem_budget, max_tile_b):
    """Pick the batch tile so the working set fits the VMEM budget."""
    B16 = _round_up(max(B, 1), 16)
    # Resident across the whole grid: weights/biases (assume 2x buffering even
    # for constant-index blocks) + the resident f32 output block.
    resident = (2 * w_bytes * (d_in * H + H * H + H)
                + 2 * 4 * (2 * H + 2)
                + 4 * B16)
    # Per-row cost per grid step: double-buffered input tile + f32
    # intermediates for the two hidden layers (+ narrow-dtype copies).
    per_row = 2 * d_in * x_bytes + 4 * 4 * H + 2 * H * x_bytes + 16
    avail = max(vmem_budget - resident, 16 * per_row)
    cap = min(avail // per_row, max_tile_b, 4096)
    cap = max(16, (int(cap) // 16) * 16)
    if B16 <= cap:
        return B16                        # single tile, at most 15 pad rows
    num_tiles = -(-B // cap)
    return _round_up(-(-B // num_tiles), 16)   # ~evenly divide -> minimal pad


def value_forward(state, params, *, stream_dtype=jnp.float32, max_tile_b=4096):
    """ValueNetwork forward. state: (B, num_inputs) -> (B, 1) float32."""
    state = jnp.asarray(state)
    B, d_in = state.shape
    H = params["w1"].shape[1]

    x_bytes = jnp.dtype(stream_dtype).itemsize
    vmem_limit = _vmem_limit_bytes()
    tile_b = _choose_tile_b(B, d_in, H, x_bytes, x_bytes,
                            vmem_limit // 2, max_tile_b)
    num_tiles = -(-B // tile_b)
    B_pad = num_tiles * tile_b

    x = state.astype(stream_dtype)
    if B_pad != B:
        # Only materialized when needed; tile_b is chosen so this is at most a
        # few rows for typical batch sizes.
        x = jnp.pad(x, ((0, B_pad - B), (0, 0)))

    w1 = params["w1"].astype(stream_dtype)
    w2 = params["w2"].astype(stream_dtype)
    w3 = params["w3"].astype(stream_dtype)      # stored as (1, H)
    b1 = params["b1"].astype(jnp.float32)
    b2 = params["b2"].astype(jnp.float32)
    b3 = params["b3"].astype(jnp.float32)       # (1, 1)

    out = pl.pallas_call(
        _value_kernel,
        out_shape=jax.ShapeDtypeStruct((num_tiles, tile_b), jnp.float32),
        grid=(num_tiles,),
        in_specs=[
            # activations: streamed, auto double-buffered
            pl.BlockSpec((tile_b, d_in), lambda i: (i, 0)),
            # weights/biases: constant block index -> fetched once, resident
            pl.BlockSpec((d_in, H), lambda i: (0, 0)),
            pl.BlockSpec((1, H), lambda i: (0, 0)),
            pl.BlockSpec((H, H), lambda i: (0, 0)),
            pl.BlockSpec((1, H), lambda i: (0, 0)),
            pl.BlockSpec((1, H), lambda i: (0, 0)),
            pl.BlockSpec((1, 1), lambda i: (0, 0)),
        ],
        # Full output block, constant index -> VMEM-resident across the grid;
        # written back to HBM once at the end (lane-dense rows, no masked
        # 1-lane stores, no per-step writeback DMA).
        out_specs=pl.BlockSpec((num_tiles, tile_b), lambda i: (0, 0)),
        compiler_params=pltpu.CompilerParams(
            dimension_semantics=("arbitrary",),
            vmem_limit_bytes=vmem_limit,
        ),
    )(x, w1, b1, w2, b2, w3, b3)

    return out.reshape(B_pad, 1)[:B]


def xavier_uniform(key, fan_in, fan_out, shape, gain=1.0):
    # torch.nn.init.xavier_uniform_ with gain=1 (fan_in/fan_out symmetric).
    bound = gain * jnp.sqrt(6.0 / (fan_in + fan_out))
    return jax.random.uniform(key, shape, jnp.float32, -bound, bound)


def init_value_params(key, num_inputs, hidden_dim):
    ks = jax.random.split(key, 3)
    return {
        # w1/w2 stored as (in, out) so the kernel computes x @ W; w3 stored as
        # (1, H) so layer 3 is a lane-dense (1,H)x(tile_b,H)^T contraction.
        # All numerically equivalent to PyTorch nn.Linear.
        "w1": xavier_uniform(ks[0], num_inputs, hidden_dim, (num_inputs, hidden_dim)),
        "b1": jnp.zeros((1, hidden_dim), jnp.float32),
        "w2": xavier_uniform(ks[1], hidden_dim, hidden_dim, (hidden_dim, hidden_dim)),
        "b2": jnp.zeros((1, hidden_dim), jnp.float32),
        "w3": xavier_uniform(ks[2], hidden_dim, 1, (1, hidden_dim)),
        "b3": jnp.zeros((1, 1), jnp.float32),
    }


def value_ref(state, params, stream_dtype=jnp.float32):
    """Pure-JAX reference mirroring the kernel's dtype flow.

    With stream_dtype=float32 this is exactly the PyTorch forward:
    relu(x@W1+b1) -> relu(.@W2+b2) -> .@W3+b3.
    """
    sd = stream_dtype
    f32 = jnp.float32
    x = jnp.asarray(state, f32).astype(sd).astype(f32)
    w1 = params["w1"].astype(sd).astype(f32)
    w2 = params["w2"].astype(sd).astype(f32)
    w3 = params["w3"].astype(sd).astype(f32)
    h = jnp.maximum(x @ w1 + params["b1"], 0.0).astype(sd).astype(f32)
    h = jnp.maximum(h @ w2 + params["b2"], 0.0).astype(sd).astype(f32)
    return h @ w3.T + params["b3"]


if __name__ == "__main__":
    # Small shapes consistent with ValueNetwork(num_inputs, hidden_dim)
    batch, num_inputs, hidden_dim = 8, 8, 32

    key = jax.random.PRNGKey(0)
    k_params, k_state, k_big, k_multi, k_bf16 = jax.random.split(key, 5)

    params = init_value_params(k_params, num_inputs, hidden_dim)

    # 1) Small batch, f32.
    state = jax.random.normal(k_state, (batch, num_inputs), jnp.float32)
    v = jax.block_until_ready(value_forward(state, params))
    assert v.shape == (batch, 1)
    assert jnp.allclose(v, value_ref(state, params), atol=1e-4, rtol=1e-4)

    # 2) Ragged batch needing padding, f32 (single large tile).
    big_batch = 1111
    state_big = jax.random.normal(k_big, (big_batch, num_inputs), jnp.float32)
    v_big = jax.block_until_ready(value_forward(state_big, params))
    assert v_big.shape == (big_batch, 1)
    assert jnp.allclose(v_big, value_ref(state_big, params), atol=1e-4, rtol=1e-4)

    # 3) Multi-tile grid path (force a small tile cap).
    multi_batch = 600
    state_multi = jax.random.normal(k_multi, (multi_batch, num_inputs), jnp.float32)
    v_multi = jax.block_until_ready(
        value_forward(state_multi, params, max_tile_b=128))
    assert v_multi.shape == (multi_batch, 1)
    assert jnp.allclose(v_multi, value_ref(state_multi, params),
                        atol=1e-4, rtol=1e-4)

    # 4) bf16 streaming path (f32 accumulation), compared to a bf16-cast ref.
    bf_batch = 256
    state_bf = jax.random.normal(k_bf16, (bf_batch, num_inputs), jnp.float32)
    v_bf = jax.block_until_ready(
        value_forward(state_bf, params, stream_dtype=jnp.bfloat16))
    assert v_bf.shape == (bf_batch, 1)
    assert jnp.allclose(v_bf, value_ref(state_bf, params, jnp.bfloat16),
                        atol=1e-2, rtol=1e-2)

    print("KERNEL_OK")
</pallas_src>

<mosaic_0001>
module attributes {stable_mosaic.version = 11 : i64} {
  func.func @_value_kernel(%arg0: i32, %arg1: memref<16x8xf32, #tpu.memory_space<vmem>>, %arg2: memref<8x32xf32, #tpu.memory_space<vmem>>, %arg3: memref<1x32xf32, #tpu.memory_space<vmem>>, %arg4: memref<32x32xf32, #tpu.memory_space<vmem>>, %arg5: memref<1x32xf32, #tpu.memory_space<vmem>>, %arg6: memref<1x32xf32, #tpu.memory_space<vmem>>, %arg7: memref<1x1xf32, #tpu.memory_space<vmem>>, %arg8: memref<1x16xf32, #tpu.memory_space<vmem>>) attributes {dimension_semantics = [#tpu.dimension_semantics<arbitrary>], iteration_bounds = array<i64: 1>, scalar_prefetch = 0 : i64, scratch_operands = 0 : i64, tpu.core_type = #tpu.core_type<tc>, window_params = [{transform_indices = @transform_0, window_bounds = array<i64: 16, 8>}, {pipeline_mode = #tpu.pipeline_mode<synchronous>, transform_indices = @transform_1, window_bounds = array<i64: 8, 32>}, {pipeline_mode = #tpu.pipeline_mode<synchronous>, transform_indices = @transform_2, window_bounds = array<i64: 1, 32>}, {pipeline_mode = #tpu.pipeline_mode<synchronous>, transform_indices = @transform_3, window_bounds = array<i64: 32, 32>}, {pipeline_mode = #tpu.pipeline_mode<synchronous>, transform_indices = @transform_4, window_bounds = array<i64: 1, 32>}, {pipeline_mode = #tpu.pipeline_mode<synchronous>, transform_indices = @transform_5, window_bounds = array<i64: 1, 32>}, {pipeline_mode = #tpu.pipeline_mode<synchronous>, transform_indices = @transform_6, window_bounds = array<i64: 1, 1>}, {pipeline_mode = #tpu.pipeline_mode<synchronous>, transform_indices = @transform_7, window_bounds = array<i64: 1, 16>}]} {
    %c0 = arith.constant 0 : index
    %c0_0 = arith.constant 0 : index
    %0 = vector.load %arg1[%c0, %c0_0] : memref<16x8xf32, #tpu.memory_space<vmem>>, vector<16x8xf32>
    %c0_1 = arith.constant 0 : index
    %c0_2 = arith.constant 0 : index
    %1 = vector.load %arg2[%c0_1, %c0_2] : memref<8x32xf32, #tpu.memory_space<vmem>>, vector<8x32xf32>
    %cst = arith.constant dense<0.000000e+00> : vector<16x32xf32>
    %2 = tpu.matmul %0, %1, %cst {dimension_numbers = #tpu.dot_dimension_numbers<[1], [0], [0], [1], [0, 0, 1, 1], [], []>} : vector<16x8xf32>, vector<8x32xf32>, vector<16x32xf32> -> vector<16x32xf32>
    %c0_3 = arith.constant 0 : index
    %c0_4 = arith.constant 0 : index
    %3 = vector.load %arg3[%c0_3, %c0_4] : memref<1x32xf32, #tpu.memory_space<vmem>>, vector<1x32xf32>
    %4 = vector.broadcast %3 : vector<1x32xf32> to vector<16x32xf32>
    %5 = arith.addf %2, %4 : vector<16x32xf32>
    %cst_5 = arith.constant 0.000000e+00 : f32
    %6 = vector.broadcast %cst_5 : f32 to vector<16x32xf32>
    %7 = arith.maximumf %5, %6 : vector<16x32xf32>
    %c0_6 = arith.constant 0 : index
    %c0_7 = arith.constant 0 : index
    %8 = vector.load %arg4[%c0_6, %c0_7] : memref<32x32xf32, #tpu.memory_space<vmem>>, vector<32x32xf32>
    %cst_8 = arith.constant dense<0.000000e+00> : vector<16x32xf32>
    %9 = tpu.matmul %7, %8, %cst_8 {dimension_numbers = #tpu.dot_dimension_numbers<[1], [0], [0], [1], [0, 0, 1, 1], [], []>} : vector<16x32xf32>, vector<32x32xf32>, vector<16x32xf32> -> vector<16x32xf32>
    %c0_9 = arith.constant 0 : index
    %c0_10 = arith.constant 0 : index
    %10 = vector.load %arg5[%c0_9, %c0_10] : memref<1x32xf32, #tpu.memory_space<vmem>>, vector<1x32xf32>
    %11 = vector.broadcast %10 : vector<1x32xf32> to vector<16x32xf32>
    %12 = arith.addf %9, %11 : vector<16x32xf32>
    %cst_11 = arith.constant 0.000000e+00 : f32
    %13 = vector.broadcast %cst_11 : f32 to vector<16x32xf32>
    %14 = arith.maximumf %12, %13 : vector<16x32xf32>
    %c0_12 = arith.constant 0 : index
    %c0_13 = arith.constant 0 : index
    %15 = vector.load %arg6[%c0_12, %c0_13] : memref<1x32xf32, #tpu.memory_space<vmem>>, vector<1x32xf32>
    %cst_14 = arith.constant dense<0.000000e+00> : vector<1x16xf32>
    %16 = tpu.matmul %15, %14, %cst_14 {dimension_numbers = #tpu.dot_dimension_numbers<[1], [1], [0], [0], [0, 0, 1, 0], [], []>} : vector<1x32xf32>, vector<16x32xf32>, vector<1x16xf32> -> vector<1x16xf32>
    %c0_15 = arith.constant 0 : index
    %c0_16 = arith.constant 0 : index
    %17 = vector.load %arg7[%c0_15, %c0_16] : memref<1x1xf32, #tpu.memory_space<vmem>>, vector<1x1xf32>
    %18 = vector.broadcast %17 : vector<1x1xf32> to vector<1x16xf32>
    %19 = arith.addf %16, %18 : vector<1x16xf32>
    %20 = arith.index_cast %arg0 : i32 to index
    %c0_17 = arith.constant 0 : index
    %21 = vector.load %arg8[%20, %c0_17] : memref<1x16xf32, #tpu.memory_space<vmem>>, vector<1x16xf32>
    tpu.vector_store %arg8[%20, %c0_17], %19 {strides = array<i32>} : memref<1x16xf32, #tpu.memory_space<vmem>>, vector<1x16xf32>,
    return
  }
  func.func @transform_0(%arg0: i32) -> (i32, i32) {
    %c0_i32 = arith.constant 0 : i32
    %c0_i32_0 = arith.constant 0 : i32
    return %arg0, %c0_i32 : i32, i32
  }
  func.func @transform_1(%arg0: i32) -> (i32, i32) {
    %c0_i32 = arith.constant 0 : i32
    %c0_i32_0 = arith.constant 0 : i32
    %c0_i32_1 = arith.constant 0 : i32
    return %c0_i32, %c0_i32_0 : i32, i32
  }
  func.func @transform_2(%arg0: i32) -> (i32, i32) {
    %c0_i32 = arith.constant 0 : i32
    %c0_i32_0 = arith.constant 0 : i32
    %c0_i32_1 = arith.constant 0 : i32
    return %c0_i32, %c0_i32_0 : i32, i32
  }
  func.func @transform_3(%arg0: i32) -> (i32, i32) {
    %c0_i32 = arith.constant 0 : i32
    %c0_i32_0 = arith.constant 0 : i32
    %c0_i32_1 = arith.constant 0 : i32
    return %c0_i32, %c0_i32_0 : i32, i32
  }
  func.func @transform_4(%arg0: i32) -> (i32, i32) {
    %c0_i32 = arith.constant 0 : i32
    %c0_i32_0 = arith.constant 0 : i32
    %c0_i32_1 = arith.constant 0 : i32
    return %c0_i32, %c0_i32_0 : i32, i32
  }
  func.func @transform_5(%arg0: i32) -> (i32, i32) {
    %c0_i32 = arith.constant 0 : i32
    %c0_i32_0 = arith.constant 0 : i32
    %c0_i32_1 = arith.constant 0 : i32
    return %c0_i32, %c0_i32_0 : i32, i32
  }
  func.func @transform_6(%arg0: i32) -> (i32, i32) {
    %c0_i32 = arith.constant 0 : i32
    %c0_i32_0 = arith.constant 0 : i32
    %c0_i32_1 = arith.constant 0 : i32
    return %c0_i32, %c0_i32_0 : i32, i32
  }
  func.func @transform_7(%arg0: i32) -> (i32, i32) {
    %c0_i32 = arith.constant 0 : i32
    %c0_i32_0 = arith.constant 0 : i32
    %c0_i32_1 = arith.constant 0 : i32
    return %c0_i32, %c0_i32_0 : i32, i32
  }
}

</mosaic_0001>

<llo_original>
// kernel: tpu_custom_call.1
$region0: #{tpu_custom_call.1}
  #allocation0 [shape = 'u32[]', space=smem, size = 0x4, offset = 0x4, fixed_abs, tag = 'smem constant byte address 0x4 - core index']
  #allocation1 [shape = 'u32[144,128]{1,0:T(1,128)}', space=vmem, size = 0x12000, scoped, tag = 'internal scratch']
  #allocation2 [shape = 'f32[1,1]{1,0:T(1,128)S(1)}', space=vmem, size = 0x200, scoped, tag = 'scoped memory for tpu_custom_call.1']
  %s0 = inlined_call_operand.vmem [shape: f32[16,8], index: 0, kind: input, shape index: {}]
  %s1 = inlined_call_operand.vmem [shape: f32[8,32], index: 1, kind: input, shape index: {}]
  %s2 = inlined_call_operand.vmem [shape: f32[1,32], index: 2, kind: input, shape index: {}]
  %s3 = inlined_call_operand.hbm [shape: f32[32,32], index: 3, kind: input, shape index: {}]
  %s4 = inlined_call_operand.vmem [shape: f32[1,32], index: 4, kind: input, shape index: {}]
  %s5 = inlined_call_operand.vmem [shape: f32[1,32], index: 5, kind: input, shape index: {}]
  %s6 = inlined_call_operand.<no memory space> [shape: f32[1,1], index: 6, kind: input, shape index: {}]
  %s7 = inlined_call_operand.hbm [shape: f32[1,16], index: 7, kind: output, shape index: {}]
  %s8 = sld [smem:[#allocation0]]
  $region42: #{tpu_custom_call.1} parent=0
    _
  %s10 = ssub.s32 1, %s8
  %s11 = scalar_select 0, %s10, %s8
  %v12 = vstv %s6
  %13 = vst [vmem:[#allocation2] sm:$0x1] %v12
  $region1: #{tpu_custom_call.1} parent=0
    #allocation3 [shape = 'u8[16384]{0}', space=vmem, size = 0x4000, scoped, tag = 'input window, operand 3, single buffered']
    #allocation4 [shape = 's32[1]{0}', space=sflag, size = 0x4, scoped, tag = 'scoped memory for tpu_custom_call.1']
    #allocation5 [shape = 's32[1]{0}', space=sflag, size = 0x4, scoped, tag = 'scoped memory for tpu_custom_call.1']
    #allocation6 [shape = 'u8[512]{0}', space=vmem, size = 0x400, scoped, tag = 'output window, operand 0, single buffered']
    %14 = vsyncpa [#allocation4], 0
    %15 = vsyncpa [#allocation5], 0
    // Predicated region
    $region2: #{tpu_custom_call.1} parent=1 // pred_check
      _
    $region3: #{tpu_custom_call.1} parent=1 // pred_check_branch
      %17 = sbr.rel (0) target = $region5
    $region4: #{tpu_custom_call.1} parent=1 // pred_region
      _
    $region5: #{tpu_custom_call.1} parent=1 // pred_fallthru
      _
    // Predicated region
    $region6: #{tpu_custom_call.1} parent=1 // pred_check
      _
    $region7: #{tpu_custom_call.1} parent=1 // pred_check_branch
      %19 = sbr.rel (0) target = $region9
    $region8: #{tpu_custom_call.1} parent=1 // pred_region
      _
    $region9: #{tpu_custom_call.1} parent=1 // pred_fallthru
      _
    // Predicated region
    $region10: #{tpu_custom_call.1} parent=1 // pred_check
      _
    $region11: #{tpu_custom_call.1} parent=1 // pred_check_branch
      %21 = sbr.rel (0) target = $region13
    $region12: #{tpu_custom_call.1} parent=1 // pred_region
      _
    $region13: #{tpu_custom_call.1} parent=1 // pred_fallthru
      _
    // Predicated region
    $region14: #{tpu_custom_call.1} parent=1 // pred_check
      _
    $region15: #{tpu_custom_call.1} parent=1 // pred_check_branch
      %23 = sbr.rel (0) target = $region17
    $region16: #{tpu_custom_call.1} parent=1 // pred_region
      %s25 = ssub.s32 512, 512
      %26 = vsyncadd [#allocation4], %s25
      %s27 = sshll.u32 [#allocation3], 4
      %s28 = int_to_ptr.vmem [resolvable:$true] %s27
      %33 = dma.hbm_to_vmem [thread:$0]  %s3, 512, %s28, [#allocation4], 128, 128, 8
    $region17: #{tpu_custom_call.1} parent=1 // pred_fallthru
      _
    // Predicated region
    $region18: #{tpu_custom_call.1} parent=1 // pred_check
      _
    $region19: #{tpu_custom_call.1} parent=1 // pred_check_branch
      %35 = sbr.rel (0) target = $region21
    $region20: #{tpu_custom_call.1} parent=1 // pred_region
      _
    $region21: #{tpu_custom_call.1} parent=1 // pred_fallthru
      _
    // Predicated region
    $region22: #{tpu_custom_call.1} parent=1 // pred_check
      _
    $region23: #{tpu_custom_call.1} parent=1 // pred_check_branch
      %37 = sbr.rel (0) target = $region25
    $region24: #{tpu_custom_call.1} parent=1 // pred_region
      _
    $region25: #{tpu_custom_call.1} parent=1 // pred_fallthru
      _
    // Predicated region
    $region26: #{tpu_custom_call.1} parent=1 // pred_check
      _
    $region27: #{tpu_custom_call.1} parent=1 // pred_check_branch
      %39 = sbr.rel (0) target = $region29
    $region28: #{tpu_custom_call.1} parent=1 // pred_region
      _
    $region29: #{tpu_custom_call.1} parent=1 // pred_fallthru
      _
    // Predicated region
    $region30: #{tpu_custom_call.1} parent=1 // pred_check
      _
    $region31: #{tpu_custom_call.1} parent=1 // pred_check_branch
      %41 = sbr.rel (0) target = $region33
    $region32: #{tpu_custom_call.1} parent=1 // pred_region
      %42 = dma.done [#allocation4], 512
    $region33: #{tpu_custom_call.1} parent=1 // pred_fallthru
      _
    %v43 = vld [vmem:[%s0] sm:$0xff]
    %v44 = vld [vmem:[%s0 + $0x8] sm:$0xff]
    %v45 = vld [vmem:[%s1] sm:$0xff]
    %v46 = vld [vmem:[%s2] sm:$0x1]
    %v48 = vlaneseq
    %v49 = vshrl.u32 %v48, 7
    %v50 = vsub.s32 0, %v49
    %v51 = vrot.slane %v46, %v50
    %vm53 = vcmask 64512
    %v55 = vsel %vm53, %v43, 0
    %v58 = vsel %vm53, %v44, 0
    %60 = vmatprep.subr.mxu0 0.0
    %61 = vmatpush1.msra.mxu0 0.0
    %62 = vmatprep.subr.mxu0 0.0
    %63 = vmatpush1.msra.mxu0 0.0
    %64 = vmatprep.subr.mxu0 0.0
    %65 = vmatpush1.msra.mxu0 0.0
    %66 = vmatprep.subr.mxu0 0.0
    %67 = vmatpush1.msra.mxu0 0.0
    %68 = vmatprep.subr.mxu0 0.0
    %69 = vmatpush1.msra.mxu0 0.0
    %70 = vmatprep.subr.mxu0 0.0
    %71 = vmatpush1.msra.mxu0 0.0
    %72 = vmatprep.subr.mxu0 0.0
    %73 = vmatpush1.msra.mxu0 0.0
    %74 = vmatprep.subr.mxu0 0.0
    %75 = vmatpush1.msra.mxu0 0.0
    %76 = vmatprep.subr.mxu0 0.0
    %77 = vmatpush1.msra.mxu0 0.0
    %78 = vmatprep.subr.mxu0 0.0
    %79 = vmatpush1.msra.mxu0 0.0
    %80 = vmatprep.subr.mxu0 0.0
    %81 = vmatpush1.msra.mxu0 0.0
    %82 = vmatprep.subr.mxu0 0.0
    %83 = vmatpush1.msra.mxu0 0.0
    %84 = vmatprep.subr.mxu0 0.0
    %85 = vmatpush1.msra.mxu0 0.0
    %86 = vmatprep.subr.mxu0 0.0
    %87 = vmatpush1.msra.mxu0 0.0
    %88 = vmatprep.subr.mxu0 0.0
    %89 = vmatpush1.msra.mxu0 0.0
    %90 = vmatprep.subr.mxu0 0.0
    %91 = vmatpush1.msra.mxu0 %v45
    %92 = vmatprep.subr.mxu0 0.0
    %93 = vmatpush2.msra.mxu0 0.0
    %94 = vmatprep.subr.mxu0 0.0
    %95 = vmatpush2.msra.mxu0 0.0
    %96 = vmatprep.subr.mxu0 0.0
    %97 = vmatpush2.msra.mxu0 0.0
    %98 = vmatprep.subr.mxu0 0.0
    %99 = vmatpush2.msra.mxu0 0.0
    %100 = vmatprep.subr.mxu0 0.0
    %101 = vmatpush2.msra.mxu0 0.0
    %102 = vmatprep.subr.mxu0 0.0
    %103 = vmatpush2.msra.mxu0 0.0
    %104 = vmatprep.subr.mxu0 0.0
    %105 = vmatpush2.msra.mxu0 0.0
    %106 = vmatprep.subr.mxu0 0.0
    %107 = vmatpush2.msra.mxu0 0.0
    %108 = vmatprep.subr.mxu0 0.0
    %109 = vmatpush2.msra.mxu0 0.0
    %110 = vmatprep.subr.mxu0 0.0
    %111 = vmatpush2.msra.mxu0 0.0
    %112 = vmatprep.subr.mxu0 0.0
    %113 = vmatpush2.msra.mxu0 0.0
    %114 = vmatprep.subr.mxu0 0.0
    %115 = vmatpush2.msra.mxu0 0.0
    %116 = vmatprep.subr.mxu0 0.0
    %117 = vmatpush2.msra.mxu0 0.0
    %118 = vmatprep.subr.mxu0 0.0
    %119 = vmatpush2.msra.mxu0 0.0
    %120 = vmatprep.subr.mxu0 0.0
    %121 = vmatpush2.msra.mxu0 0.0
    %122 = vmatprep.subr.mxu0 0.0
    %123 = vmatpush2.msra.mxu0 0.0
    %124 = vmatprep.mubr.f32.mxu0 0.0
    %125 = vmatmul.mubr.f32.gmra.mxu0 %v55
    %v126 = vpop.f32.mrf.mxu0
    %v127 = vadd.f32 %v51, %v126
    %v128 = vpop.f32.mrf.mxu0
    %129 = vmatprep.mubr.f32.mxu0 0.0
    %130 = vmatmul.mubr.f32.gmra.mxu0 %v58
    %v131 = vpop.f32.mrf.mxu0
    %v132 = vadd.f32 %v51, %v131
    %v133 = vpop.f32.mrf.mxu0
    %134 = vdwg.mxu0
    %v135 = vmax.f32 %v127, 0.0
    %v136 = vmax.f32 %v132, 0.0
    %v137 = vld [vmem:[#allocation3] sm:$0xff]
    %v138 = vld [vmem:[#allocation3 + $0x8] sm:$0xff]
    %v139 = vld [vmem:[#allocation3 + $0x10] sm:$0xff]
    %v140 = vld [vmem:[#allocation3 + $0x18] sm:$0xff]
    %v141 = vld [vmem:[%s4] sm:$0x1]
    %v143 = vlaneseq
    %v144 = vshrl.u32 %v143, 7
    %v145 = vsub.s32 0, %v144
    %v146 = vrot.slane %v141, %v145
    %vm148 = vcmask 261120
    %v150 = vsel %vm148, %v135, 0
    %v153 = vsel %vm148, %v136, 0
    %155 = vmatprep.subr.mxu0 0.0
    %156 = vmatpush1.msra.mxu0 0.0
    %157 = vmatprep.subr.mxu0 0.0
    %158 = vmatpush1.msra.mxu0 0.0
    %159 = vmatprep.subr.mxu0 0.0
    %160 = vmatpush1.msra.mxu0 0.0
    %161 = vmatprep.subr.mxu0 0.0
    %162 = vmatpush1.msra.mxu0 0.0
    %163 = vmatprep.subr.mxu0 0.0
    %164 = vmatpush1.msra.mxu0 0.0
    %165 = vmatprep.subr.mxu0 0.0
    %166 = vmatpush1.msra.mxu0 0.0
    %167 = vmatprep.subr.mxu0 0.0
    %168 = vmatpush1.msra.mxu0 0.0
    %169 = vmatprep.subr.mxu0 0.0
    %170 = vmatpush1.msra.mxu0 0.0
    %171 = vmatprep.subr.mxu0 0.0
    %172 = vmatpush1.msra.mxu0 0.0
    %173 = vmatprep.subr.mxu0 0.0
    %174 = vmatpush1.msra.mxu0 0.0
    %175 = vmatprep.subr.mxu0 0.0
    %176 = vmatpush1.msra.mxu0 0.0
    %177 = vmatprep.subr.mxu0 0.0
    %178 = vmatpush1.msra.mxu0 0.0
    %179 = vmatprep.subr.mxu0 0.0
    %180 = vmatpush1.msra.mxu0 %v140
    %181 = vmatprep.subr.mxu0 0.0
    %182 = vmatpush1.msra.mxu0 %v139
    %183 = vmatprep.subr.mxu0 0.0
    %184 = vmatpush1.msra.mxu0 %v138
    %185 = vmatprep.subr.mxu0 0.0
    %186 = vmatpush1.msra.mxu0 %v137
    %187 = vmatprep.subr.mxu0 0.0
    %188 = vmatpush2.msra.mxu0 0.0
    %189 = vmatprep.subr.mxu0 0.0
    %190 = vmatpush2.msra.mxu0 0.0
    %191 = vmatprep.subr.mxu0 0.0
    %192 = vmatpush2.msra.mxu0 0.0
    %193 = vmatprep.subr.mxu0 0.0
    %194 = vmatpush2.msra.mxu0 0.0
    %195 = vmatprep.subr.mxu0 0.0
    %196 = vmatpush2.msra.mxu0 0.0
    %197 = vmatprep.subr.mxu0 0.0
    %198 = vmatpush2.msra.mxu0 0.0
    %199 = vmatprep.subr.mxu0 0.0
    %200 = vmatpush2.msra.mxu0 0.0
    %201 = vmatprep.subr.mxu0 0.0
    %202 = vmatpush2.msra.mxu0 0.0
    %203 = vmatprep.subr.mxu0 0.0
    %204 = vmatpush2.msra.mxu0 0.0
    %205 = vmatprep.subr.mxu0 0.0
    %206 = vmatpush2.msra.mxu0 0.0
    %207 = vmatprep.subr.mxu0 0.0
    %208 = vmatpush2.msra.mxu0 0.0
    %209 = vmatprep.subr.mxu0 0.0
    %210 = vmatpush2.msra.mxu0 0.0
    %211 = vmatprep.subr.mxu0 0.0
    %212 = vmatpush2.msra.mxu0 0.0
    %213 = vmatprep.subr.mxu0 0.0
    %214 = vmatpush2.msra.mxu0 0.0
    %215 = vmatprep.subr.mxu0 0.0
    %216 = vmatpush2.msra.mxu0 0.0
    %217 = vmatprep.subr.mxu0 0.0
    %218 = vmatpush2.msra.mxu0 0.0
    %219 = vmatprep.mubr.f32.mxu0 0.0
    %220 = vmatmul.mubr.f32.gmra.mxu0 %v150
    %v221 = vpop.f32.mrf.mxu0
    %v222 = vadd.f32 %v146, %v221
    %v223 = vpop.f32.mrf.mxu0
    %224 = vmatprep.mubr.f32.mxu0 0.0
    %225 = vmatmul.mubr.f32.gmra.mxu0 %v153
    %v226 = vpop.f32.mrf.mxu0
    %v227 = vadd.f32 %v146, %v226
    %v228 = vpop.f32.mrf.mxu0
    %229 = vdwg.mxu0
    %v230 = vmax.f32 %v222, 0.0
    %v231 = vmax.f32 %v227, 0.0
    %v232 = vld [vmem:[%s5] sm:$0x1]
    %v233 = vld [vmem:[#allocation2] sm:$0x1]
    %235 = vset.pattern.permute.xlu0 0
    %236 = vperm.xlu0 %235, %v233
    %v237 = vpop.permute.xlu0 %236
    %v239 = vlaneseq
    %v240 = vshrl.u32 %v239, 7
    %v241 = vsub.s32 0, %v240
    %v242 = vrot.slane %v237, %v241
    %v244 = vsel %vm148, %v232, 0
    %v247 = vsel %vm148, %v230, 0
    %v250 = vsel %vm148, %v231, 0
    %252 = vmatprep.subr.mxu0 0.0
    %253 = vmatpush1.xpose.msra.mxu0 0.0
    %254 = vmatprep.subr.mxu0 0.0
    %255 = vmatpush1.xpose.msra.mxu0 0.0
    %256 = vmatprep.subr.mxu0 0.0
    %257 = vmatpush1.xpose.msra.mxu0 0.0
    %258 = vmatprep.subr.mxu0 0.0
    %259 = vmatpush1.xpose.msra.mxu0 0.0
    %260 = vmatprep.subr.mxu0 0.0
    %261 = vmatpush1.xpose.msra.mxu0 0.0
    %262 = vmatprep.subr.mxu0 0.0
    %263 = vmatpush1.xpose.msra.mxu0 0.0
    %264 = vmatprep.subr.mxu0 0.0
    %265 = vmatpush1.xpose.msra.mxu0 0.0
    %266 = vmatprep.subr.mxu0 0.0
    %267 = vmatpush1.xpose.msra.mxu0 0.0
    %268 = vmatprep.subr.mxu0 0.0
    %269 = vmatpush1.xpose.msra.mxu0 0.0
    %270 = vmatprep.subr.mxu0 0.0
    %271 = vmatpush1.xpose.msra.mxu0 0.0
    %272 = vmatprep.subr.mxu0 0.0
    %273 = vmatpush1.xpose.msra.mxu0 0.0
    %274 = vmatprep.subr.mxu0 0.0
    %275 = vmatpush1.xpose.msra.mxu0 0.0
    %276 = vmatprep.subr.mxu0 0.0
    %277 = vmatpush1.xpose.msra.mxu0 0.0
    %278 = vmatprep.subr.mxu0 0.0
    %279 = vmatpush1.xpose.msra.mxu0 0.0
    %280 = vmatprep.subr.mxu0 0.0
    %281 = vmatpush1.xpose.msra.mxu0 %v250
    %282 = vmatprep.subr.mxu0 0.0
    %283 = vmatpush1.xpose.msra.mxu0 %v247
    %284 = vmatprep.subr.mxu0 0.0
    %285 = vmatpush2.xpose.msra.mxu0 0.0
    %286 = vmatprep.subr.mxu0 0.0
    %287 = vmatpush2.xpose.msra.mxu0 0.0
    %288 = vmatprep.subr.mxu0 0.0
    %289 = vmatpush2.xpose.msra.mxu0 0.0
    %290 = vmatprep.subr.mxu0 0.0
    %291 = vmatpush2.xpose.msra.mxu0 0.0
    %292 = vmatprep.subr.mxu0 0.0
    %293 = vmatpush2.xpose.msra.mxu0 0.0
    %294 = vmatprep.subr.mxu0 0.0
    %295 = vmatpush2.xpose.msra.mxu0 0.0
    %296 = vmatprep.subr.mxu0 0.0
    %297 = vmatpush2.xpose.msra.mxu0 0.0
    %298 = vmatprep.subr.mxu0 0.0
    %299 = vmatpush2.xpose.msra.mxu0 0.0
    %300 = vmatprep.subr.mxu0 0.0
    %301 = vmatpush2.xpose.msra.mxu0 0.0
    %302 = vmatprep.subr.mxu0 0.0
    %303 = vmatpush2.xpose.msra.mxu0 0.0
    %304 = vmatprep.subr.mxu0 0.0
    %305 = vmatpush2.xpose.msra.mxu0 0.0
    %306 = vmatprep.subr.mxu0 0.0
    %307 = vmatpush2.xpose.msra.mxu0 0.0
    %308 = vmatprep.subr.mxu0 0.0
    %309 = vmatpush2.xpose.msra.mxu0 0.0
    %310 = vmatprep.subr.mxu0 0.0
    %311 = vmatpush2.xpose.msra.mxu0 0.0
    %312 = vmatprep.subr.mxu0 0.0
    %313 = vmatpush2.xpose.msra.mxu0 0.0
    %314 = vmatprep.subr.mxu0 0.0
    %315 = vmatpush2.xpose.msra.mxu0 0.0
    %316 = vmatprep.mubr.f32.mxu0 0.0
    %317 = vmatmul.mubr.f32.gmra.mxu0 %v244
    %v318 = vpop.f32.mrf.mxu0
    %v319 = vadd.f32 %v242, %v318
    %v320 = vpop.f32.mrf.mxu0
    %321 = vdwg.mxu0
    %vm322 = vcmask 122880
    %323 = vst.msk [vmem:[#allocation6] sm:$0x1] %vm322, %v319
    // Predicated region
    $region34: #{tpu_custom_call.1} parent=1 // pred_check
      _
    $region35: #{tpu_custom_call.1} parent=1 // pred_check_branch
      %325 = sbr.rel (0) target = $region37
    $region36: #{tpu_custom_call.1} parent=1 // pred_region
      %s327 = ssub.s32 16, 16
      %328 = vsyncadd [#allocation5], %s327
      %s330 = sshll.u32 [#allocation6], 4
      %s331 = int_to_ptr.vmem [resolvable:$true] %s330
      %333 = dma.vmem_to_hbm [thread:$0]  %s331, 16, %s7, [#allocation5]
    $region37: #{tpu_custom_call.1} parent=1 // pred_fallthru
      _
    // Predicated region
    $region38: #{tpu_custom_call.1} parent=1 // pred_check
      _
    $region39: #{tpu_custom_call.1} parent=1 // pred_check_branch
      %335 = sbr.rel (0) target = $region41
    $region40: #{tpu_custom_call.1} parent=1 // pred_region
      %336 = dma.done [#allocation5], 16
    $region41: #{tpu_custom_call.1} parent=1 // pred_fallthru
      _
    %337 = vsyncpa [#allocation4], 1
    %338 = vsyncpa [#allocation5], 1

</llo_original>
